<compile_context>
chip_gen: v6e
topology: v6e:2x2x1
jax: 0.10.0
libtpu: 0.0.40
codegen_flags: <defaults>
</compile_context>

<pallas_src>
import functools

import jax
import jax.numpy as jnp
from jax.experimental import pallas as pl
from jax.experimental.pallas import tpu as pltpu

_LANE = 128
_SUBLANE = 8
_MAX_TILE_ROWS = 2048  # 2048 x 128 x 4B = 1 MiB per input block
_NUM_SLOTS = 2         # partial-sum slots; maps to the 2 TensorCores on v7x


def _round_up(x, m):
    return ((x + m - 1) // m) * m


def _l1_partial_sum_kernel(a_ref, b_ref, out_ref, *, tile_rows, steps_per_core,
                           valid_rows):
    """Accumulates per-core partial sums of |a - b| into a resident (8,128) tile."""
    c = pl.program_id(0)  # partial-sum slot (TensorCore on v7x)
    s = pl.program_id(1)  # reduction step within this slot

    @pl.when(s == 0)
    def _init():
        out_ref[...] = jnp.zeros_like(out_ref)

    # Native-dtype DMA; cast to f32 in the VPU (free slot, no-op for f32 inputs).
    diff = jnp.abs(a_ref[...].astype(jnp.float32) - b_ref[...].astype(jnp.float32))

    block_idx = c * steps_per_core + s
    row_start = block_idx * tile_rows

    def _fold(x):
        # Fold the (tile_rows, 128) tile into a single-vreg (8, 128) accumulator
        # with a tree of cheap cross-vreg VPU adds.
        return x.reshape(tile_rows // _SUBLANE, _SUBLANE, _LANE).sum(axis=0)

    # Hot path: fully in-bounds block -> no masking cost.
    @pl.when(row_start + tile_rows <= valid_rows)
    def _full():
        out_ref[...] += _fold(diff)

    # Boundary (or fully out-of-range) block -> mask stale rows to zero.
    @pl.when(row_start + tile_rows > valid_rows)
    def _partial():
        row_ids = row_start + jax.lax.broadcasted_iota(
            jnp.int32, (tile_rows, _LANE), 0)
        out_ref[...] += _fold(jnp.where(row_ids < valid_rows, diff, 0.0))


def _l1_mean_weighted_pallas(a, b, weight):
    """weight * mean(|a - b|) via a tiled, megacore-aware Pallas reduction."""
    assert a.shape == b.shape, (a.shape, b.shape)
    n_elem = int(a.size)

    def _prep(x):
        x = x.reshape(-1)
        pad = (-n_elem) % _LANE
        if pad:  # only the lane tail; skipped whenever n_elem % 128 == 0
            x = jnp.pad(x, (0, pad))
        return x.reshape(-1, _LANE)

    a2 = _prep(a)
    b2 = _prep(b)
    rows = a2.shape[0]

    tile_rows = min(_round_up(rows, _SUBLANE), _MAX_TILE_ROWS)
    num_blocks = (rows + tile_rows - 1) // tile_rows
    steps_per_core = (num_blocks + _NUM_SLOTS - 1) // _NUM_SLOTS
    grid = (_NUM_SLOTS, steps_per_core)

    def in_idx(c, s):
        bi = c * steps_per_core + s
        # Clamp so the DMA origin is always in-bounds; the kernel masks the
        # contribution of any block whose logical rows fall past `rows`.
        return (jnp.minimum(bi, num_blocks - 1), 0)

    kernel = functools.partial(
        _l1_partial_sum_kernel,
        tile_rows=tile_rows,
        steps_per_core=steps_per_core,
        valid_rows=rows,
    )

    partials = pl.pallas_call(
        kernel,
        out_shape=jax.ShapeDtypeStruct((_NUM_SLOTS * _SUBLANE, _LANE), jnp.float32),
        grid_spec=pltpu.PrefetchScalarGridSpec(
            num_scalar_prefetch=0,
            grid=grid,
            in_specs=[
                pl.BlockSpec((tile_rows, _LANE), in_idx),
                pl.BlockSpec((tile_rows, _LANE), in_idx),
            ],
            out_specs=pl.BlockSpec((_SUBLANE, _LANE), lambda c, s: (c, 0)),
        ),
        compiler_params=pltpu.CompilerParams(
            dimension_semantics=("parallel", "arbitrary"),
        ),
    )(a2, b2)

    # Tiny (16,128) final reduce + scale done in the wrapper.
    return (float(weight) / float(n_elem)) * jnp.sum(partials)


class VGGLoss:
    """JAX/Pallas port of the PyTorch VGGLoss module's forward pass."""

    def __init__(self, start_lay):
        self.weights = [1.0 / 32, 1.0 / 16, 1.0 / 8, 1.0 / 4, 1.0]
        self.start_lay = start_lay

    def __call__(self, x_vgg, x_rec_vgg):
        w = self.weights[self.start_lay]
        target = jax.lax.stop_gradient(x_vgg[self.start_lay])  # torch .detach()
        # TODO(synk): forward only; a custom_vjp (d|a-b| = sign(a-b) * scale)
        # would be needed before differentiating through this loss.
        return _l1_mean_weighted_pallas(x_rec_vgg[self.start_lay], target, w)


if __name__ == "__main__":
    key = jax.random.PRNGKey(0)

    # Synthetic "VGG feature pyramids": 5 levels in NCHW, like relu1_1..relu5_1.
    feat_shapes = [
        (2, 4, 16, 16),
        (2, 8, 8, 8),
        (2, 16, 4, 4),
        (2, 32, 2, 2),
        (2, 64, 1, 1),
    ]
    keys = jax.random.split(key, 2 * len(feat_shapes))
    x_vgg = [
        jax.random.normal(keys[i], s, dtype=jnp.float32)
        for i, s in enumerate(feat_shapes)
    ]
    x_rec_vgg = [
        jax.random.normal(keys[len(feat_shapes) + i], s, dtype=jnp.float32)
        for i, s in enumerate(feat_shapes)
    ]

    start_lay = 2
    loss_mod = VGGLoss(start_lay)

    loss = jax.block_until_ready(loss_mod(x_vgg, x_rec_vgg))
    ref = loss_mod.weights[start_lay] * jnp.mean(
        jnp.abs(x_rec_vgg[start_lay] - x_vgg[start_lay])
    )
    assert jnp.allclose(loss, ref, rtol=1e-5, atol=1e-6), (loss, ref)

    # Extra coverage 1: n_elem % 128 != 0 -> lane-tail padding + masked block.
    ka, kb = jax.random.split(jax.random.PRNGKey(1))
    a_odd = jax.random.normal(ka, (3, 5, 7, 2), dtype=jnp.float32)
    b_odd = jax.random.normal(kb, (3, 5, 7, 2), dtype=jnp.float32)
    got = jax.block_until_ready(_l1_mean_weighted_pallas(a_odd, b_odd, 0.25))
    want = 0.25 * jnp.mean(jnp.abs(a_odd - b_odd))
    assert jnp.allclose(got, want, rtol=1e-5, atol=1e-6), (got, want)

    # Extra coverage 2: bf16 inputs, fully in-bounds (unmasked) blocks.
    kc, kd = jax.random.split(jax.random.PRNGKey(2))
    a_bf = jax.random.normal(kc, (2, 8, 16, 16), dtype=jnp.bfloat16)
    b_bf = jax.random.normal(kd, (2, 8, 16, 16), dtype=jnp.bfloat16)
    got_bf = jax.block_until_ready(_l1_mean_weighted_pallas(a_bf, b_bf, 0.125))
    want_bf = 0.125 * jnp.mean(
        jnp.abs(a_bf.astype(jnp.float32) - b_bf.astype(jnp.float32))
    )
    assert jnp.allclose(got_bf, want_bf, rtol=1e-4, atol=1e-6), (got_bf, want_bf)

    print("KERNEL_OK")
</pallas_src>

<mosaic_0001>
module attributes {stable_mosaic.version = 11 : i64} {
  func.func @_l1_partial_sum_kernel(%arg0: i32, %arg1: i32, %arg2: memref<8x128xf32, #tpu.memory_space<vmem>>, %arg3: memref<8x128xf32, #tpu.memory_space<vmem>>, %arg4: memref<8x128xf32, #tpu.memory_space<vmem>>) attributes {dimension_semantics = [#tpu.dimension_semantics<parallel>, #tpu.dimension_semantics<arbitrary>], iteration_bounds = array<i64: 2, 1>, scalar_prefetch = 0 : i64, scratch_operands = 0 : i64, tpu.core_type = #tpu.core_type<tc>, window_params = [{transform_indices = @transform_0, window_bounds = array<i64: 8, 128>}, {transform_indices = @transform_1, window_bounds = array<i64: 8, 128>}, {transform_indices = @transform_2, window_bounds = array<i64: 8, 128>}]} {
    %c0_i32 = arith.constant 0 : i32
    %0 = arith.cmpi eq, %arg1, %c0_i32 : i32
    %1 = arith.extui %0 : i1 to i32
    %c0_i32_0 = arith.constant 0 : i32
    %2 = arith.cmpi ne, %1, %c0_i32_0 : i32
    scf.if %2 {
      %cst = arith.constant 0.000000e+00 : f32
      %18 = vector.broadcast %cst : f32 to vector<8x128xf32>
      %c0_9 = arith.constant 0 : index
      %c0_10 = arith.constant 0 : index
      %19 = vector.load %arg4[%c0_9, %c0_10] : memref<8x128xf32, #tpu.memory_space<vmem>>, vector<8x128xf32>
      tpu.vector_store %arg4[%c0_9, %c0_10], %18 {strides = array<i32>} : memref<8x128xf32, #tpu.memory_space<vmem>>, vector<8x128xf32>,
    } else {
    }
    %c0 = arith.constant 0 : index
    %c0_1 = arith.constant 0 : index
    %3 = vector.load %arg2[%c0, %c0_1] : memref<8x128xf32, #tpu.memory_space<vmem>>, vector<8x128xf32>
    %c0_2 = arith.constant 0 : index
    %c0_3 = arith.constant 0 : index
    %4 = vector.load %arg3[%c0_2, %c0_3] : memref<8x128xf32, #tpu.memory_space<vmem>>, vector<8x128xf32>
    %5 = arith.subf %3, %4 : vector<8x128xf32>
    %6 = math.absf %5 : vector<8x128xf32>
    %c1_i32 = arith.constant 1 : i32
    %7 = arith.muli %arg0, %c1_i32 : i32
    %8 = arith.addi %7, %arg1 : i32
    %c8_i32 = arith.constant 8 : i32
    %9 = arith.muli %8, %c8_i32 : i32
    %c8_i32_4 = arith.constant 8 : i32
    %10 = arith.addi %9, %c8_i32_4 : i32
    %c4_i32 = arith.constant 4 : i32
    %11 = arith.cmpi sle, %10, %c4_i32 : i32
    %12 = arith.extui %11 : i1 to i32
    %c0_i32_5 = arith.constant 0 : i32
    %13 = arith.cmpi ne, %12, %c0_i32_5 : i32
    scf.if %13 {
      %c0_9 = arith.constant 0 : index
      %c0_10 = arith.constant 0 : index
      %18 = vector.load %arg4[%c0_9, %c0_10] : memref<8x128xf32, #tpu.memory_space<vmem>>, vector<8x128xf32>
      %19 = vector.shape_cast %6 : vector<8x128xf32> to vector<1x8x128xf32>
      %cst = arith.constant dense<0.000000e+00> : vector<8x128xf32>
      %20 = vector.multi_reduction <add>, %19, %cst [0] : vector<1x8x128xf32> to vector<8x128xf32>
      %21 = arith.addf %18, %20 : vector<8x128xf32>
      %c0_11 = arith.constant 0 : index
      %c0_12 = arith.constant 0 : index
      %22 = vector.load %arg4[%c0_11, %c0_12] : memref<8x128xf32, #tpu.memory_space<vmem>>, vector<8x128xf32>
      tpu.vector_store %arg4[%c0_11, %c0_12], %21 {strides = array<i32>} : memref<8x128xf32, #tpu.memory_space<vmem>>, vector<8x128xf32>,
    } else {
    }
    %c8_i32_6 = arith.constant 8 : i32
    %14 = arith.addi %9, %c8_i32_6 : i32
    %c4_i32_7 = arith.constant 4 : i32
    %15 = arith.cmpi sgt, %14, %c4_i32_7 : i32
    %16 = arith.extui %15 : i1 to i32
    %c0_i32_8 = arith.constant 0 : i32
    %17 = arith.cmpi ne, %16, %c0_i32_8 : i32
    scf.if %17 {
      %18 = tpu.iota {dimensions = array<i32: 0>} : vector<8x128xi32>
      %19 = vector.broadcast %9 : i32 to vector<8x128xi32>
      %20 = arith.addi %19, %18 : vector<8x128xi32>
      %c0_9 = arith.constant 0 : index
      %c0_10 = arith.constant 0 : index
      %21 = vector.load %arg4[%c0_9, %c0_10] : memref<8x128xf32, #tpu.memory_space<vmem>>, vector<8x128xf32>
      %c4_i32_11 = arith.constant 4 : i32
      %22 = vector.broadcast %c4_i32_11 : i32 to vector<8x128xi32>
      %23 = arith.cmpi slt, %20, %22 : vector<8x128xi32>
      %cst = arith.constant 0.000000e+00 : f32
      %24 = vector.broadcast %cst : f32 to vector<8x128xf32>
      %25 = arith.select %23, %6, %24 : vector<8x128xi1>, vector<8x128xf32>
      %26 = vector.shape_cast %25 : vector<8x128xf32> to vector<1x8x128xf32>
      %cst_12 = arith.constant dense<0.000000e+00> : vector<8x128xf32>
      %27 = vector.multi_reduction <add>, %26, %cst_12 [0] : vector<1x8x128xf32> to vector<8x128xf32>
      %28 = arith.addf %21, %27 : vector<8x128xf32>
      %c0_13 = arith.constant 0 : index
      %c0_14 = arith.constant 0 : index
      %29 = vector.load %arg4[%c0_13, %c0_14] : memref<8x128xf32, #tpu.memory_space<vmem>>, vector<8x128xf32>
      tpu.vector_store %arg4[%c0_13, %c0_14], %28 {strides = array<i32>} : memref<8x128xf32, #tpu.memory_space<vmem>>, vector<8x128xf32>,
    } else {
    }
    return
  }
  func.func @transform_0(%arg0: i32, %arg1: i32) -> (i32, i32) {
    %c1_i32 = arith.constant 1 : i32
    %0 = arith.muli %arg0, %c1_i32 : i32
    %1 = arith.addi %0, %arg1 : i32
    %c0_i32 = arith.constant 0 : i32
    %2 = arith.minsi %1, %c0_i32 : i32
    %c0_i32_0 = arith.constant 0 : i32
    %c0_i32_1 = arith.constant 0 : i32
    return %2, %c0_i32_0 : i32, i32
  }
  func.func @transform_1(%arg0: i32, %arg1: i32) -> (i32, i32) {
    %c1_i32 = arith.constant 1 : i32
    %0 = arith.muli %arg0, %c1_i32 : i32
    %1 = arith.addi %0, %arg1 : i32
    %c0_i32 = arith.constant 0 : i32
    %2 = arith.minsi %1, %c0_i32 : i32
    %c0_i32_0 = arith.constant 0 : i32
    %c0_i32_1 = arith.constant 0 : i32
    return %2, %c0_i32_0 : i32, i32
  }
  func.func @transform_2(%arg0: i32, %arg1: i32) -> (i32, i32) {
    %c0_i32 = arith.constant 0 : i32
    %c0_i32_0 = arith.constant 0 : i32
    return %arg0, %c0_i32 : i32, i32
  }
}

</mosaic_0001>

<llo_original>
// kernel: tpu_custom_call.1
$region0: #{tpu_custom_call.1}
  #allocation0 [shape = 'u32[]', space=smem, size = 0x4, offset = 0x4, fixed_abs, tag = 'smem constant byte address 0x4 - core index']
  #allocation1 [shape = 'u32[144,128]{1,0:T(1,128)}', space=vmem, size = 0x12000, scoped, tag = 'internal scratch']
  %s0 = inlined_call_operand.hbm [shape: f32[4,128], index: 0, kind: input, shape index: {}]
  %s1 = inlined_call_operand.hbm [shape: f32[4,128], index: 1, kind: input, shape index: {}]
  %s2 = inlined_call_operand.hbm [shape: f32[16,128], index: 2, kind: output, shape index: {}]
  %s3 = sld [smem:[#allocation0]]
  $region61: #{tpu_custom_call.1} parent=0
    _
  %s5 = ssub.s32 1, %s3
  %s6 = scalar_select 0, %s5, %s3
  $region1: #{tpu_custom_call.1} parent=0
    #allocation2 [shape = 'u8[8192]{0}', space=vmem, size = 0x2000, scoped, tag = 'input window, operand 0']
    #allocation3 [shape = 's32[2]{0}', space=sflag, size = 0x8, scoped, tag = 'scoped memory for tpu_custom_call.1']
    #allocation4 [shape = 's32[2]{0}', space=sflag, size = 0x8, scoped, tag = 'scoped memory for tpu_custom_call.1']
    #allocation5 [shape = 'u8[8192]{0}', space=vmem, size = 0x2000, scoped, tag = 'input window, operand 1']
    #allocation6 [shape = 's32[2]{0}', space=sflag, size = 0x8, scoped, tag = 'scoped memory for tpu_custom_call.1']
    #allocation7 [shape = 'u8[8192]{0}', space=vmem, size = 0x2000, scoped, tag = 'output window, operand 0']
    %7 = vsyncpa [#allocation3], 0
    %s8 = scalar_lea.sflag [#allocation3], 1
    %9 = vsyncpa %s8, 0
    %10 = vsyncpa [#allocation6], 0
    %s11 = scalar_lea.sflag [#allocation6], 1
    %12 = vsyncpa %s11, 0
    %13 = vsyncpa [#allocation4], 0
    %s14 = scalar_lea.sflag [#allocation4], 1
    %15 = vsyncpa %s14, 0
    loop: start=0, step=1, limit=4
    $region2: #{tpu_custom_call.1} parent=1 // loop_pre_header
      _
    $region3: #{tpu_custom_call.1} parent=1 // loop_header
      %s17 = sphi 0, %s21
      %p18 = scmp.ge.s32.totalorder %s17, 4
      %s24 = sphi 0, %s36
      %s25 = sphi 0, %s32
      %s26 = sphi 0, %s24
      %s27 = sphi 0, %s25
      %s28 = sphi 0, %s26
      %s29 = sphi 0, %s27
      %s45 = sphi 0, %s47
      %s48 = sphi 0, %s45
      %s49 = sphi 0, %s48
      %s65 = sphi 0, %s49
      %s77 = sphi 0, %s79
      %s80 = sphi 0, %s77
      %s81 = sphi 0, %s80
      %s97 = sphi 0, %s81
      %s103 = sphi 0, %s105
      %s106 = sphi 0, %s103
      %s107 = sphi 0, %s106
      %s123 = sphi 0, %s107
    $region4: #{tpu_custom_call.1} parent=1 // loop_header_branch
      %20 = sbr.rel (%p18) target = $region8
    $region5: #{tpu_custom_call.1} parent=1 // loop_body
      %s22 = ssub.s32 %s17, 1
      %s23 = ssub.s32 %s17, 2
      %s30 = sadd.s32 1, %s25
      %p31 = scmp.ge.s32.totalorder %s30, 1
      %s32 = scalar_select %p31, 0, %s30
      %s33 = sadd.s32 1, %s24
      %s34 = scalar_select %p31, %s33, %s24
      %p35 = scmp.ge.s32.totalorder %s34, 2
      %s36 = scalar_select %p35, 0, %s34
      %s37 = sadd.s32 %s24, %s25
      %p38 = scmp.lt.s32.totalorder %s37, 0
      %s39 = scalar_select %p38, %s37, 0
      %s40 = sadd.s32 %s36, %s32
      %p41 = scmp.lt.s32.totalorder %s40, 0
      %s42 = scalar_select %p41, %s40, 0
      %s43 = ssub.s32 %s39, %s42
      %p44 = scmp.eq.s32.totalorder %s43, 0
      %s46 = sadd.s32 %s45, 1
      %s47 = scalar_select %p44, %s45, %s46
      %p50 = pneg %p44
      %p51 = scmp.eq.s32.totalorder %s17, 1
      %p52 = por %p50, %p51
      %p53 = scmp.ne.s32.totalorder %s45, %s48
      %p54 = scmp.eq.s32.totalorder %s17, 0
      %p55 = por %p53, %p54
      %p56 = scmp.ne.s32.totalorder %s45, %s48
      %p57 = scmp.eq.s32.totalorder %s22, 1
      %p58 = por %p56, %p57
      %p59 = scmp.ne.s32.totalorder %s48, %s49
      %p60 = scmp.eq.s32.totalorder %s22, 0
      %p61 = por %p59, %p60
      %p62 = scmp.ne.s32.totalorder %s48, %s49
      %p63 = scmp.eq.s32.totalorder %s23, 1
      %p64 = por %p62, %p63
      %p66 = scmp.ne.s32.totalorder %s49, %s65
      %p67 = scmp.eq.s32.totalorder %s23, 0
      %p68 = por %p66, %p67
      %s69 = sadd.s32 %s24, %s25
      %p70 = scmp.lt.s32.totalorder %s69, 0
      %s71 = scalar_select %p70, %s69, 0
      %s72 = sadd.s32 %s36, %s32
      %p73 = scmp.lt.s32.totalorder %s72, 0
      %s74 = scalar_select %p73, %s72, 0
      %s75 = ssub.s32 %s71, %s74
      %p76 = scmp.eq.s32.totalorder %s75, 0
      %s78 = sadd.s32 %s77, 1
      %s79 = scalar_select %p76, %s77, %s78
      %p82 = pneg %p76
      %p83 = scmp.eq.s32.totalorder %s17, 1
      %p84 = por %p82, %p83
      %p85 = scmp.ne.s32.totalorder %s77, %s80
      %p86 = scmp.eq.s32.totalorder %s17, 0
      %p87 = por %p85, %p86
      %p88 = scmp.ne.s32.totalorder %s77, %s80
      %p89 = scmp.eq.s32.totalorder %s22, 1
      %p90 = por %p88, %p89
      %p91 = scmp.ne.s32.totalorder %s80, %s81
      %p92 = scmp.eq.s32.totalorder %s22, 0
      %p93 = por %p91, %p92
      %p94 = scmp.ne.s32.totalorder %s80, %s81
      %p95 = scmp.eq.s32.totalorder %s23, 1
      %p96 = por %p94, %p95
      %p98 = scmp.ne.s32.totalorder %s81, %s97
      %p99 = scmp.eq.s32.totalorder %s23, 0
      %p100 = por %p98, %p99
      %s101 = ssub.s32 %s24, %s36
      %p102 = scmp.eq.s32.totalorder %s101, 0
      %s104 = sadd.s32 %s103, 1
      %s105 = scalar_select %p102, %s103, %s104
      %p108 = pneg %p102
      %p109 = scmp.eq.s32.totalorder %s17, 1
      %p110 = por %p108, %p109
      %p111 = scmp.ne.s32.totalorder %s103, %s106
      %p112 = scmp.eq.s32.totalorder %s17, 0
      %p113 = por %p111, %p112
      %p114 = scmp.ne.s32.totalorder %s103, %s106
      %p115 = scmp.eq.s32.totalorder %s22, 1
      %p116 = por %p114, %p115
      %p117 = scmp.ne.s32.totalorder %s106, %s107
      %p118 = scmp.eq.s32.totalorder %s22, 0
      %p119 = por %p117, %p118
      %p120 = scmp.ne.s32.totalorder %s106, %s107
      %p121 = scmp.eq.s32.totalorder %s23, 1
      %p122 = por %p120, %p121
      %p124 = scmp.ne.s32.totalorder %s107, %s123
      %p125 = scmp.eq.s32.totalorder %s23, 0
      %p126 = por %p124, %p125
      %p127 = scmp.le.s32.totalorder 1, %s17
      %p128 = scmp.lt.s32.totalorder %s17, 3
      %p129 = pnand %p127, %p128
      %p130 = pneg %p129
      // Predicated region
      $region9: #{tpu_custom_call.1} parent=5 // pred_check
        _
      $region10: #{tpu_custom_call.1} parent=5 // pred_check_branch
        %132 = sbr.rel (%p129) target = $region12
      $region11: #{tpu_custom_call.1} parent=5 // pred_region
        %s133 = ssub.s32 %s17, 1
      $region12: #{tpu_custom_call.1} parent=5 // pred_fallthru
        _
      %p134 = scmp.lt.s32.totalorder %s17, 2
      // Predicated region
      $region13: #{tpu_custom_call.1} parent=5 // pred_check
        %p135 = pneg %p134
      $region14: #{tpu_custom_call.1} parent=5 // pred_check_branch
        %137 = sbr.rel (%p135) target = $region16
      $region15: #{tpu_custom_call.1} parent=5 // pred_region
        // Predicated region
        $region17: #{tpu_custom_call.1} parent=15 // pred_check
          %p138 = pneg %p55
        $region18: #{tpu_custom_call.1} parent=15 // pred_check_branch
          %140 = sbr.rel (%p138) target = $region20
        $region19: #{tpu_custom_call.1} parent=15 // pred_region
          %s141 = sand.u32 %s45, 1
          %s142 = scalar_lea.sflag [#allocation3], %s141
          %s143 = sand.u32 %s45, 1
          %s144 = smul.addr %s143, 8
          %s145 = scalar_lea.vmem [#allocation2], %s144
          %s146 = sadd.s32 %s24, %s25
          %p147 = scmp.lt.s32.totalorder %s146, 0
          %s148 = scalar_select %p147, %s146, 0
          %s149 = smul.u32 2, %s148
          %s150 = ssub.s32 1, %s149
          %s151 = smul.u32 64, %s150
          %s153 = ssub.s32 128, %s151
          %154 = vsyncadd %s142, %s153
          %p155 = scmp.ne.s32.totalorder 0, %s151
          %s156 = smul.addr %s149, 64
          %s157 = scalar_lea.hbm %s0, %s156
          %s158 = smul.u32 4, %s150
          %s159 = sshll.u32 %s145, 4
          %s160 = int_to_ptr.vmem [resolvable:$true] %s159
          %s161 = sshll.u32 %s158, 4
          %165 = dma.hbm_to_vmem [thread:$0]  (%p155), %s157, %s161, %s160, %s142, 64, 64, 4
        $region20: #{tpu_custom_call.1} parent=15 // pred_fallthru
          _
        // Predicated region
        $region21: #{tpu_custom_call.1} parent=15 // pred_check
          %p166 = pneg %p87
        $region22: #{tpu_custom_call.1} parent=15 // pred_check_branch
          %168 = sbr.rel (%p166) target = $region24
        $region23: #{tpu_custom_call.1} parent=15 // pred_region
          %s169 = sand.u32 %s77, 1
          %s170 = scalar_lea.sflag [#allocation6], %s169
          %s171 = sand.u32 %s77, 1
          %s172 = smul.addr %s171, 8
          %s173 = scalar_lea.vmem [#allocation5], %s172
          %s174 = sadd.s32 %s24, %s25
          %p175 = scmp.lt.s32.totalorder %s174, 0
          %s176 = scalar_select %p175, %s174, 0
          %s177 = smul.u32 2, %s176
          %s178 = ssub.s32 1, %s177
          %s179 = smul.u32 64, %s178
          %s181 = ssub.s32 128, %s179
          %182 = vsyncadd %s170, %s181
          %p183 = scmp.ne.s32.totalorder 0, %s179
          %s184 = smul.addr %s177, 64
          %s185 = scalar_lea.hbm %s1, %s184
          %s186 = smul.u32 4, %s178
          %s187 = sshll.u32 %s173, 4
          %s188 = int_to_ptr.vmem [resolvable:$true] %s187
          %s189 = sshll.u32 %s186, 4
          %193 = dma.hbm_to_vmem [thread:$0]  (%p183), %s185, %s189, %s188, %s170, 64, 64, 4
        $region24: #{tpu_custom_call.1} parent=15 // pred_fallthru
          _
      $region16: #{tpu_custom_call.1} parent=5 // pred_fallthru
        _
      %p194 = scmp.le.s32.totalorder 1, %s17
      %p195 = scmp.lt.s32.totalorder %s17, 3
      %p196 = pnand %p194, %p195
      %p197 = pneg %p196
      // Predicated region
      $region25: #{tpu_custom_call.1} parent=5 // pred_check
        _
      $region26: #{tpu_custom_call.1} parent=5 // pred_check_branch
        %199 = sbr.rel (%p196) target = $region28
      $region27: #{tpu_custom_call.1} parent=5 // pred_region
        %s200 = ssub.s32 %s17, 1
        %s201 = sand.u32 %s48, 1
        %s202 = scalar_lea.sflag [#allocation3], %s201
        %s203 = sand.u32 %s48, 1
        %s204 = smul.addr %s203, 8
        %s205 = scalar_lea.vmem [#allocation2], %s204
        // Predicated region
        $region29: #{tpu_custom_call.1} parent=27 // pred_check
          %p206 = pneg %p61
        $region30: #{tpu_custom_call.1} parent=27 // pred_check_branch
          %208 = sbr.rel (%p206) target = $region32
        $region31: #{tpu_custom_call.1} parent=27 // pred_region
          %209 = dma.done %s202, 128
        $region32: #{tpu_custom_call.1} parent=27 // pred_fallthru
          _
        %s210 = sand.u32 %s80, 1
        %s211 = scalar_lea.sflag [#allocation6], %s210
        %s212 = sand.u32 %s80, 1
        %s213 = smul.addr %s212, 8
        %s214 = scalar_lea.vmem [#allocation5], %s213
        // Predicated region
        $region33: #{tpu_custom_call.1} parent=27 // pred_check
          %p215 = pneg %p93
        $region34: #{tpu_custom_call.1} parent=27 // pred_check_branch
          %217 = sbr.rel (%p215) target = $region36
        $region35: #{tpu_custom_call.1} parent=27 // pred_region
          %218 = dma.done %s211, 128
        $region36: #{tpu_custom_call.1} parent=27 // pred_fallthru
          _
        %s219 = sand.u32 %s48, 1
        %s220 = scalar_lea.sflag [#allocation3], %s219
        %s221 = sand.u32 %s48, 1
        %s222 = smul.addr %s221, 8
        %s223 = scalar_lea.vmem [#allocation2], %s222
        %p224 = pneg %p61
        %p225 = pneg %p58
        %s226 = sand.u32 %s80, 1
        %s227 = scalar_lea.sflag [#allocation6], %s226
        %s228 = sand.u32 %s80, 1
        %s229 = smul.addr %s228, 8
        %s230 = scalar_lea.vmem [#allocation5], %s229
        %p231 = pneg %p93
        %p232 = pneg %p90
        %p233 = pneg %p119
        %p234 = pneg %p116
        %s235 = sand.u32 %s106, 1
        %s236 = scalar_lea.sflag [#allocation4], %s235
        %s237 = sand.u32 %s106, 1
        %s238 = smul.addr %s237, 8
        %s239 = scalar_lea.vmem [#allocation7], %s238
        %s240 = sadd.s32 %s26, %s27
        %p241 = scmp.lt.s32.totalorder %s240, 0
        %s242 = scalar_select %p241, %s240, 0
        %s243 = smul.u32 2, %s242
        %s244 = ssub.s32 1, %s243
        %s245 = smul.u32 64, %s244
        %s246 = sadd.s32 %s26, %s27
        %p247 = scmp.lt.s32.totalorder %s246, 0
        %s248 = scalar_select %p247, %s246, 0
        %s249 = smul.u32 2, %s248
        %s250 = ssub.s32 1, %s249
        %s251 = smul.u32 64, %s250
        %p252 = scmp.eq.s32.totalorder %s27, 0
        // Predicated region
        $region37: #{tpu_custom_call.1} parent=27 // pred_check
          %p253 = pneg %p252
        $region38: #{tpu_custom_call.1} parent=27 // pred_check_branch
          %255 = sbr.rel (%p253) target = $region40
        $region39: #{tpu_custom_call.1} parent=27 // pred_region
          %256 = vst [vmem:[%s239] sm:$0xff] 0.0
        $region40: #{tpu_custom_call.1} parent=27 // pred_fallthru
          _
        %v257 = vld [vmem:[%s205] sm:$0xff]
        %v258 = vld [vmem:[%s214] sm:$0xff]
        %v259 = vsub.f32 %v257, %v258
        %v260 = vand.u32 2147483647, %v259
        %s261 = sadd.s32 %s26, %s27
        %s262 = smul.u32 %s261, 8
        %s263 = sadd.s32 %s262, 8
        %p264 = scmp.le.s32.totalorder %s263, 4
        // Predicated region
        $region41: #{tpu_custom_call.1} parent=27 // pred_check
          %p265 = pneg %p264
        $region42: #{tpu_custom_call.1} parent=27 // pred_check_branch
          %267 = sbr.rel (%p265) target = $region44
        $region43: #{tpu_custom_call.1} parent=27 // pred_region
          %v268 = vld [vmem:[%s239] sm:$0xff]
          %v269 = vadd.f32 %v260, 0.0
          %v270 = vadd.f32 %v268, %v269
          %271 = vst [vmem:[%s239] sm:$0xff] %v270
        $region44: #{tpu_custom_call.1} parent=27 // pred_fallthru
          _
        %p272 = scmp.gt.s32.totalorder %s263, 4
        // Predicated region
        $region45: #{tpu_custom_call.1} parent=27 // pred_check
          %p273 = pneg %p272
        $region46: #{tpu_custom_call.1} parent=27 // pred_check_branch
          %275 = sbr.rel (%p273) target = $region48
        $region47: #{tpu_custom_call.1} parent=27 // pred_region
          %v276 = vlaneseq
          %v277 = vshrl.u32 %v276, 7
          %v278 = vstv %s262
          %v279 = vadd.s32 %v278, %v277
          %v280 = vld [vmem:[%s239] sm:$0xff]
          %vm281 = vcmp.lt.s32.totalorder %v279, 4
          %v282 = vsel %vm281, %v260, 0.0
          %v283 = vadd.f32 %v282, 0.0
          %v284 = vadd.f32 %v280, %v283
          %285 = vst [vmem:[%s239] sm:$0xff] %v284
        $region48: #{tpu_custom_call.1} parent=27 // pred_fallthru
          _
        %s286 = sand.u32 %s106, 1
        %s287 = scalar_lea.sflag [#allocation4], %s286
        %s288 = sand.u32 %s106, 1
        %s289 = smul.addr %s288, 8
        %s290 = scalar_lea.vmem [#allocation7], %s289
        // Predicated region
        $region49: #{tpu_custom_call.1} parent=27 // pred_check
          %p291 = pneg %p116
        $region50: #{tpu_custom_call.1} parent=27 // pred_check_branch
          %293 = sbr.rel (%p291) target = $region52
        $region51: #{tpu_custom_call.1} parent=27 // pred_region
          %s295 = ssub.s32 128, 128
          %296 = vsyncadd %s287, %s295
          %s297 = smul.addr %s26, 128
          %s298 = scalar_lea.hbm %s2, %s297
          %s300 = sshll.u32 %s290, 4
          %s301 = int_to_ptr.vmem [resolvable:$true] %s300
          %303 = dma.vmem_to_hbm [thread:$0]  %s301, 128, %s298, %s287
        $region52: #{tpu_custom_call.1} parent=27 // pred_fallthru
          _
      $region28: #{tpu_custom_call.1} parent=5 // pred_fallthru
        _
      %p304 = scmp.le.s32.totalorder 2, %s17
      // Predicated region
      $region53: #{tpu_custom_call.1} parent=5 // pred_check
        %p305 = pneg %p304
      $region54: #{tpu_custom_call.1} parent=5 // pred_check_branch
        %307 = sbr.rel (%p305) target = $region56
      $region55: #{tpu_custom_call.1} parent=5 // pred_region
        %s308 = ssub.s32 %s17, 2
        // Predicated region
        $region57: #{tpu_custom_call.1} parent=55 // pred_check
          %p309 = pneg %p122
        $region58: #{tpu_custom_call.1} parent=55 // pred_check_branch
          %311 = sbr.rel (%p309) target = $region60
        $region59: #{tpu_custom_call.1} parent=55 // pred_region
          %s312 = sand.u32 %s107, 1
          %s313 = scalar_lea.sflag [#allocation4], %s312
          %s314 = sand.u32 %s107, 1
          %s315 = smul.addr %s314, 8
          %s316 = scalar_lea.vmem [#allocation7], %s315
          %317 = dma.done %s313, 128
        $region60: #{tpu_custom_call.1} parent=55 // pred_fallthru
          _
      $region56: #{tpu_custom_call.1} parent=5 // pred_fallthru
        _
    $region6: #{tpu_custom_call.1} parent=1 // loop_footer
      %s21 = sadd.s32 1, %s17
    $region7: #{tpu_custom_call.1} parent=1 // loop_footer_branch
      %16 = sbr.rel target = $region3
    $region8: #{tpu_custom_call.1} parent=1 // loop_exit
      _
    %318 = vsyncpa [#allocation3], 1
    %s319 = scalar_lea.sflag [#allocation3], 1
    %320 = vsyncpa %s319, 1
    %321 = vsyncpa [#allocation6], 1
    %s322 = scalar_lea.sflag [#allocation6], 1
    %323 = vsyncpa %s322, 1
    %324 = vsyncpa [#allocation4], 1
    %s325 = scalar_lea.sflag [#allocation4], 1
    %326 = vsyncpa %s325, 1

</llo_original>
